<compile_context>
chip_gen: v7x
topology: tpu7x:2x2x1
jax: 0.10.0
libtpu: 0.0.40
codegen_flags: <defaults>
</compile_context>

<pallas_src>
import functools

import jax
import jax.numpy as jnp
from jax.experimental import pallas as pl
from jax.experimental.pallas import tpu as pltpu


# ---------------------------------------------------------------------------
# Fused Pallas kernel: conv(im2col matmul) + ReLU -> avg-pool accum -> embed
# ---------------------------------------------------------------------------

def _fused_encoder_kernel(p_ref, cw_ref, cb_ref, ew_ref, eb_ref, o_ref, acc_ref,
                          *, inv_hw, nb):
    """Grid = (batch block b [parallel], spatial tile s [arbitrary, reduction]).

    p_ref  : [1, TM*NB, KKC] bf16  im2col patches; row = spatial*NB + sample
    cw_ref : [KKC, C_FEAT]   bf16  conv weight (no HBM zero padding)
    cb_ref : [1, C_FEAT]     f32   conv bias
    ew_ref : [C_FEAT, E_PAD] bf16  embed weight (lane padded)
    eb_ref : [1, E_PAD]      f32   embed bias  (lane padded)
    o_ref  : [NB, E_PAD]     f32   embeddings for this batch block (dense store)
    acc_ref: [NB, C_FEAT]    f32   per-sample pooling accumulator (one vreg)
    """
    s = pl.program_id(1)

    @pl.when(s == 0)
    def _init():
        acc_ref[...] = jnp.zeros_like(acc_ref)

    # Conv as im2col matmul on the MXU: bf16 operands, f32 accumulation.
    # Mosaic pads/masks the KKC=36 contraction depth internally.
    conv = jnp.dot(p_ref[0], cw_ref[...], preferred_element_type=jnp.float32)
    # Bias + ReLU epilogue in f32 (safe on v5e: no bf16 VPU there).
    conv = jnp.maximum(conv + cb_ref[...], 0.0)                  # [TM*NB, C_FEAT]

    # Per-sample global-avg-pool partial sums.  Rows are sample-minor, so
    # grouping by NB and summing over the leading "page" axis is sublane-aligned
    # VPU adds only (no per-step cross-sublane XLU reduce).
    tm_nb, c_feat = conv.shape
    acc_ref[...] += jnp.sum(conv.reshape(tm_nb // nb, nb, c_feat), axis=0)

    @pl.when(s == pl.num_programs(1) - 1)
    def _finalize():
        pooled = acc_ref[...] * inv_hw                           # [NB, C_FEAT] f32
        # NOTE: pooled is rounded to bf16 for the MXU embed matmul (matches the
        # in-script reference; a tiny extra rounding vs a pure-f32 Linear).
        emb = jnp.dot(pooled.astype(jnp.bfloat16), ew_ref[...],
                      preferred_element_type=jnp.float32) + eb_ref[...]
        o_ref[...] = emb                                         # (NB, E_PAD) dense store


# ---------------------------------------------------------------------------
# Glue (plain JAX): im2col, batch-block interleave, parameter prep
# ---------------------------------------------------------------------------

def _round_up(x, m):
    return (x + m - 1) // m * m


def im2col_per_sample(x_nhwc, k, stride, padding):
    """x:[N,H,W,C] -> patches [N, Ho*Wo, k*k*C] (patch channel order: kh, kw, C)."""
    n, h, w, c = x_nhwc.shape
    xp = jnp.pad(x_nhwc, ((0, 0), (padding, padding), (padding, padding), (0, 0)))
    ho = (h + 2 * padding - k) // stride + 1
    wo = (w + 2 * padding - k) // stride + 1
    taps = []
    for i in range(k):
        for j in range(k):
            taps.append(
                xp[:, i: i + stride * ho: stride, j: j + stride * wo: stride, :]
            )
    p = jnp.stack(taps, axis=3)  # [N, Ho, Wo, k*k, C]
    return p.reshape(n, ho * wo, k * k * c), ho, wo


def encoder_cnn(images_nchw, conv_w, conv_b, emb_w, emb_b, *,
                k=3, stride=2, padding=1, spatial_tile=256, batch_block=8):
    """Forward pass: synthetic-backbone conv+relu -> global avg pool -> embed."""
    x = jnp.transpose(images_nchw, (0, 2, 3, 1)).astype(jnp.float32)  # NCHW -> NHWC
    n = x.shape[0]

    patches, ho, wo = im2col_per_sample(x, k, stride, padding)   # [N, HW, KKC]
    hw = ho * wo
    kkc = patches.shape[-1]
    c_feat = conv_w.shape[1]
    e = emb_w.shape[1]
    e_pad = _round_up(e, 128)            # lane-dense embed output block

    # Batch-block by NB=8 samples per grid step; sample-minor / spatial-major
    # row interleave so per-sample pooling is pure VPU work in the kernel.
    nb = batch_block
    n_pad = _round_up(n, nb)
    n_blocks = n_pad // nb
    patches = jnp.pad(patches, ((0, n_pad - n), (0, 0), (0, 0)))
    patches = patches.reshape(n_blocks, nb, hw, kkc).transpose(0, 2, 1, 3)
    patches = patches.reshape(n_blocks, hw * nb, kkc).astype(jnp.bfloat16)

    conv_w_b = conv_w.astype(jnp.bfloat16)                       # [KKC, C_FEAT]
    conv_b_f = conv_b.reshape(1, c_feat).astype(jnp.float32)
    emb_w_p = jnp.pad(emb_w, ((0, 0), (0, e_pad - e))).astype(jnp.bfloat16)
    emb_b_p = jnp.pad(
        emb_b.reshape(1, e), ((0, 0), (0, e_pad - e))).astype(jnp.float32)

    tm = min(spatial_tile, hw)           # toy shapes: tm = hw = 64 -> s_steps = 1
    assert hw % tm == 0, "spatial_tile must divide Ho*Wo"
    s_steps = hw // tm

    kernel = functools.partial(
        _fused_encoder_kernel, inv_hw=1.0 / float(hw), nb=nb)

    out = pl.pallas_call(
        kernel,
        out_shape=jax.ShapeDtypeStruct((n_pad, e_pad), jnp.float32),
        grid_spec=pltpu.PrefetchScalarGridSpec(
            num_scalar_prefetch=0,
            grid=(n_blocks, s_steps),
            in_specs=[
                pl.BlockSpec((1, tm * nb, kkc), lambda b, s: (b, s, 0)),   # patches
                pl.BlockSpec((kkc, c_feat), lambda b, s: (0, 0)),          # conv W
                pl.BlockSpec((1, c_feat), lambda b, s: (0, 0)),            # conv b
                pl.BlockSpec((c_feat, e_pad), lambda b, s: (0, 0)),        # embed W
                pl.BlockSpec((1, e_pad), lambda b, s: (0, 0)),             # embed b
            ],
            out_specs=pl.BlockSpec((nb, e_pad), lambda b, s: (b, 0)),
            scratch_shapes=[pltpu.VMEM((nb, c_feat), jnp.float32)],
        ),
        compiler_params=pltpu.CompilerParams(
            dimension_semantics=("parallel", "arbitrary"),
            # <= ~48 MiB keeps v7x (64 MiB physical) happy; on v5e/v6e this can
            # be raised to 64-96 MiB to support TM=512+ at real ResNet sizes.
            vmem_limit_bytes=48 * 1024 * 1024,
        ),
    )(patches, conv_w_b, conv_b_f, emb_w_p, emb_b_p)

    # Strip batch padding and embed lane padding.
    return out[:n, :e]


# ---------------------------------------------------------------------------
# Main
# ---------------------------------------------------------------------------

if __name__ == "__main__":
    key = jax.random.PRNGKey(0)
    k1, k2, k3, k4, k5 = jax.random.split(key, 5)

    # Small shapes consistent with the module's forward (NCHW at the boundary).
    N, C_IN, H, W = 2, 4, 16, 16
    C_FEAT = 128          # backbone feature channels (2048 in real ResNet-50)
    EMBED = 32            # embed_size
    K, STRIDE, PAD = 3, 2, 1

    images = jax.random.normal(k1, (N, C_IN, H, W), jnp.float32)

    # Deterministic synthetic parameters (frozen backbone conv + trainable embed).
    conv_w = 0.1 * jax.random.normal(k2, (K * K * C_IN, C_FEAT), jnp.float32)
    conv_b = 0.1 * jax.random.normal(k3, (1, C_FEAT), jnp.float32)
    emb_w = 0.1 * jax.random.normal(k4, (C_FEAT, EMBED), jnp.float32)
    emb_b = 0.1 * jax.random.normal(k5, (1, EMBED), jnp.float32)

    feats = encoder_cnn(images, conv_w, conv_b, emb_w, emb_b,
                        k=K, stride=STRIDE, padding=PAD)
    jax.block_until_ready(feats)

    # Pure-JAX reference for the same synthetic pipeline (matching bf16 operand
    # rounding, f32 accumulation).
    x_nhwc = jnp.transpose(images, (0, 2, 3, 1))
    p_ref, ho, wo = im2col_per_sample(x_nhwc, K, STRIDE, PAD)   # [N, HW, KKC]
    p_bf = p_ref.astype(jnp.bfloat16).astype(jnp.float32)
    cw_bf = conv_w.astype(jnp.bfloat16).astype(jnp.float32)
    ew_bf = emb_w.astype(jnp.bfloat16).astype(jnp.float32)
    conv_ref = jnp.maximum(
        jnp.einsum("nhk,kc->nhc", p_bf, cw_bf) + conv_b.reshape(1, 1, C_FEAT), 0.0)
    pooled_ref = conv_ref.mean(axis=1)                          # [N, C_FEAT]
    pooled_bf = pooled_ref.astype(jnp.bfloat16).astype(jnp.float32)
    ref_out = pooled_bf @ ew_bf + emb_b.reshape(1, EMBED)

    assert feats.shape == (N, EMBED), feats.shape
    assert jnp.allclose(feats, ref_out, atol=1e-2, rtol=1e-2), "mismatch vs reference"

    print("KERNEL_OK")
</pallas_src>

<mosaic_0001>
module attributes {stable_mosaic.version = 11 : i64} {
  func.func @_fused_encoder_kernel(%arg0: i32, %arg1: i32, %arg2: memref<1x512x36xbf16, #tpu.memory_space<vmem>>, %arg3: memref<36x128xbf16, #tpu.memory_space<vmem>>, %arg4: memref<1x128xf32, #tpu.memory_space<vmem>>, %arg5: memref<128x128xbf16, #tpu.memory_space<vmem>>, %arg6: memref<1x128xf32, #tpu.memory_space<vmem>>, %arg7: memref<8x128xf32, #tpu.memory_space<vmem>>, %arg8: memref<8x128xf32, #tpu.memory_space<vmem>>) attributes {dimension_semantics = [#tpu.dimension_semantics<parallel>, #tpu.dimension_semantics<arbitrary>], iteration_bounds = array<i64: 1, 1>, scalar_prefetch = 0 : i64, scratch_operands = 1 : i64, tpu.core_type = #tpu.core_type<tc>, window_params = [{transform_indices = @transform_0, window_bounds = array<i64: 1, 512, 36>}, {pipeline_mode = #tpu.pipeline_mode<synchronous>, transform_indices = @transform_1, window_bounds = array<i64: 36, 128>}, {pipeline_mode = #tpu.pipeline_mode<synchronous>, transform_indices = @transform_2, window_bounds = array<i64: 1, 128>}, {pipeline_mode = #tpu.pipeline_mode<synchronous>, transform_indices = @transform_3, window_bounds = array<i64: 128, 128>}, {pipeline_mode = #tpu.pipeline_mode<synchronous>, transform_indices = @transform_4, window_bounds = array<i64: 1, 128>}, {transform_indices = @transform_5, window_bounds = array<i64: 8, 128>}]} {
    %c0_i32 = arith.constant 0 : i32
    %0 = arith.cmpi eq, %arg1, %c0_i32 : i32
    %1 = arith.extui %0 : i1 to i32
    %c0_i32_0 = arith.constant 0 : i32
    %2 = arith.cmpi ne, %1, %c0_i32_0 : i32
    scf.if %2 {
      %cst_15 = arith.constant 0.000000e+00 : f32
      %20 = vector.broadcast %cst_15 : f32 to vector<8x128xf32>
      %c0_16 = arith.constant 0 : index
      %c0_17 = arith.constant 0 : index
      %21 = vector.load %arg8[%c0_16, %c0_17] : memref<8x128xf32, #tpu.memory_space<vmem>>, vector<8x128xf32>
      tpu.vector_store %arg8[%c0_16, %c0_17], %20 {strides = array<i32>} : memref<8x128xf32, #tpu.memory_space<vmem>>, vector<8x128xf32>,
    } else {
    }
    %c0 = arith.constant 0 : index
    %c0_1 = arith.constant 0 : index
    %c0_2 = arith.constant 0 : index
    %3 = vector.load %arg2[%c0, %c0_1, %c0_2] : memref<1x512x36xbf16, #tpu.memory_space<vmem>>, vector<1x512x36xbf16>
    %4 = vector.shape_cast %3 : vector<1x512x36xbf16> to vector<512x36xbf16>
    %c0_3 = arith.constant 0 : index
    %c0_4 = arith.constant 0 : index
    %5 = vector.load %arg3[%c0_3, %c0_4] : memref<36x128xbf16, #tpu.memory_space<vmem>>, vector<36x128xbf16>
    %cst = arith.constant dense<0.000000e+00> : vector<512x128xf32>
    %6 = tpu.matmul %4, %5, %cst {dimension_numbers = #tpu.dot_dimension_numbers<[1], [0], [0], [1], [0, 0, 1, 1], [], []>} : vector<512x36xbf16>, vector<36x128xbf16>, vector<512x128xf32> -> vector<512x128xf32>
    %c0_5 = arith.constant 0 : index
    %c0_6 = arith.constant 0 : index
    %7 = vector.load %arg4[%c0_5, %c0_6] : memref<1x128xf32, #tpu.memory_space<vmem>>, vector<1x128xf32>
    %8 = vector.broadcast %7 : vector<1x128xf32> to vector<512x128xf32>
    %9 = arith.addf %6, %8 : vector<512x128xf32>
    %cst_7 = arith.constant 0.000000e+00 : f32
    %10 = vector.broadcast %cst_7 : f32 to vector<512x128xf32>
    %11 = arith.maximumf %9, %10 : vector<512x128xf32>
    %c0_8 = arith.constant 0 : index
    %c0_9 = arith.constant 0 : index
    %12 = vector.load %arg8[%c0_8, %c0_9] : memref<8x128xf32, #tpu.memory_space<vmem>>, vector<8x128xf32>
    %13 = vector.shape_cast %11 : vector<512x128xf32> to vector<64x8x128xf32>
    %cst_10 = arith.constant dense<0.000000e+00> : vector<8x128xf32>
    %14 = vector.multi_reduction <add>, %13, %cst_10 [0] : vector<64x8x128xf32> to vector<8x128xf32>
    %15 = arith.addf %12, %14 : vector<8x128xf32>
    %c0_11 = arith.constant 0 : index
    %c0_12 = arith.constant 0 : index
    %16 = vector.load %arg8[%c0_11, %c0_12] : memref<8x128xf32, #tpu.memory_space<vmem>>, vector<8x128xf32>
    tpu.vector_store %arg8[%c0_11, %c0_12], %15 {strides = array<i32>} : memref<8x128xf32, #tpu.memory_space<vmem>>, vector<8x128xf32>,
    %c0_i32_13 = arith.constant 0 : i32
    %17 = arith.cmpi eq, %arg1, %c0_i32_13 : i32
    %18 = arith.extui %17 : i1 to i32
    %c0_i32_14 = arith.constant 0 : i32
    %19 = arith.cmpi ne, %18, %c0_i32_14 : i32
    scf.if %19 {
      %c0_15 = arith.constant 0 : index
      %c0_16 = arith.constant 0 : index
      %20 = vector.load %arg8[%c0_15, %c0_16] : memref<8x128xf32, #tpu.memory_space<vmem>>, vector<8x128xf32>
      %cst_17 = arith.constant 1.562500e-02 : f32
      %21 = vector.broadcast %cst_17 : f32 to vector<8x128xf32>
      %22 = arith.mulf %20, %21 : vector<8x128xf32>
      %23 = arith.truncf %22 : vector<8x128xf32> to vector<8x128xbf16>
      %c0_18 = arith.constant 0 : index
      %c0_19 = arith.constant 0 : index
      %24 = vector.load %arg5[%c0_18, %c0_19] : memref<128x128xbf16, #tpu.memory_space<vmem>>, vector<128x128xbf16>
      %cst_20 = arith.constant dense<0.000000e+00> : vector<8x128xf32>
      %25 = tpu.matmul %23, %24, %cst_20 {dimension_numbers = #tpu.dot_dimension_numbers<[1], [0], [0], [1], [0, 0, 1, 1], [], []>} : vector<8x128xbf16>, vector<128x128xbf16>, vector<8x128xf32> -> vector<8x128xf32>
      %c0_21 = arith.constant 0 : index
      %c0_22 = arith.constant 0 : index
      %26 = vector.load %arg6[%c0_21, %c0_22] : memref<1x128xf32, #tpu.memory_space<vmem>>, vector<1x128xf32>
      %27 = vector.broadcast %26 : vector<1x128xf32> to vector<8x128xf32>
      %28 = arith.addf %25, %27 : vector<8x128xf32>
      %c0_23 = arith.constant 0 : index
      %c0_24 = arith.constant 0 : index
      %29 = vector.load %arg7[%c0_23, %c0_24] : memref<8x128xf32, #tpu.memory_space<vmem>>, vector<8x128xf32>
      tpu.vector_store %arg7[%c0_23, %c0_24], %28 {strides = array<i32>} : memref<8x128xf32, #tpu.memory_space<vmem>>, vector<8x128xf32>,
    } else {
    }
    return
  }
  func.func @transform_0(%arg0: i32, %arg1: i32) -> (i32, i32, i32) {
    %c0_i32 = arith.constant 0 : i32
    %c0_i32_0 = arith.constant 0 : i32
    return %arg0, %arg1, %c0_i32 : i32, i32, i32
  }
  func.func @transform_1(%arg0: i32, %arg1: i32) -> (i32, i32) {
    %c0_i32 = arith.constant 0 : i32
    %c0_i32_0 = arith.constant 0 : i32
    %c0_i32_1 = arith.constant 0 : i32
    return %c0_i32, %c0_i32_0 : i32, i32
  }
  func.func @transform_2(%arg0: i32, %arg1: i32) -> (i32, i32) {
    %c0_i32 = arith.constant 0 : i32
    %c0_i32_0 = arith.constant 0 : i32
    %c0_i32_1 = arith.constant 0 : i32
    return %c0_i32, %c0_i32_0 : i32, i32
  }
  func.func @transform_3(%arg0: i32, %arg1: i32) -> (i32, i32) {
    %c0_i32 = arith.constant 0 : i32
    %c0_i32_0 = arith.constant 0 : i32
    %c0_i32_1 = arith.constant 0 : i32
    return %c0_i32, %c0_i32_0 : i32, i32
  }
  func.func @transform_4(%arg0: i32, %arg1: i32) -> (i32, i32) {
    %c0_i32 = arith.constant 0 : i32
    %c0_i32_0 = arith.constant 0 : i32
    %c0_i32_1 = arith.constant 0 : i32
    return %c0_i32, %c0_i32_0 : i32, i32
  }
  func.func @transform_5(%arg0: i32, %arg1: i32) -> (i32, i32) {
    %c0_i32 = arith.constant 0 : i32
    %c0_i32_0 = arith.constant 0 : i32
    return %arg0, %c0_i32 : i32, i32
  }
}

</mosaic_0001>

<llo_original>
// kernel: tpu_custom_call.1
$region0: #{tpu_custom_call.1}
  #allocation0 [shape = 'u32[]', space=smem, size = 0x4, offset = 0x4, fixed_abs, tag = 'smem constant byte address 0x4 - core index']
  #allocation1 [shape = 'u32[144,128]{1,0:T(1,128)}', space=vmem, size = 0x12000, scoped, tag = 'internal scratch']
  #allocation2 [shape = 'f32[8,128]{1,0:T(8,128)}', space=vmem, size = 0x1000, scoped, tag = 'scratch operand']
  %s0 = inlined_call_operand.vmem [shape: bf16[1,512,36], index: 0, kind: input, shape index: {}]
  %s1 = inlined_call_operand.vmem [shape: bf16[36,128], index: 1, kind: input, shape index: {}]
  %s2 = inlined_call_operand.vmem [shape: f32[1,128], index: 2, kind: input, shape index: {}]
  %s3 = inlined_call_operand.vmem [shape: bf16[128,128], index: 3, kind: input, shape index: {}]
  %s4 = inlined_call_operand.vmem [shape: f32[1,128], index: 4, kind: input, shape index: {}]
  %s5 = inlined_call_operand.hbm [shape: f32[8,128], index: 5, kind: output, shape index: {}]
  %s6 = sld [smem:[#allocation0]]
  $region38: #{tpu_custom_call.1} parent=0
    _
  %s8 = ssub.s32 1, %s6
  %s9 = scalar_select 0, %s8, %s6
  $region1: #{tpu_custom_call.1} parent=0
    #allocation3 [shape = 'u8[4096]{0}', space=vmem, size = 0x1000, scoped, tag = 'output window, operand 0, single buffered']
    #allocation4 [shape = 's32[1]{0}', space=sflag, size = 0x4, scoped, tag = 'scoped memory for tpu_custom_call.1']
    %10 = vsyncpa [#allocation4], 0
    // Predicated region
    $region2: #{tpu_custom_call.1} parent=1 // pred_check
      _
    $region3: #{tpu_custom_call.1} parent=1 // pred_check_branch
      %12 = sbr.rel (0) target = $region5
    $region4: #{tpu_custom_call.1} parent=1 // pred_region
      _
    $region5: #{tpu_custom_call.1} parent=1 // pred_fallthru
      _
    // Predicated region
    $region6: #{tpu_custom_call.1} parent=1 // pred_check
      _
    $region7: #{tpu_custom_call.1} parent=1 // pred_check_branch
      %14 = sbr.rel (0) target = $region9
    $region8: #{tpu_custom_call.1} parent=1 // pred_region
      _
    $region9: #{tpu_custom_call.1} parent=1 // pred_fallthru
      _
    // Predicated region
    $region10: #{tpu_custom_call.1} parent=1 // pred_check
      _
    $region11: #{tpu_custom_call.1} parent=1 // pred_check_branch
      %16 = sbr.rel (0) target = $region13
    $region12: #{tpu_custom_call.1} parent=1 // pred_region
      _
    $region13: #{tpu_custom_call.1} parent=1 // pred_fallthru
      _
    // Predicated region
    $region14: #{tpu_custom_call.1} parent=1 // pred_check
      _
    $region15: #{tpu_custom_call.1} parent=1 // pred_check_branch
      %18 = sbr.rel (0) target = $region17
    $region16: #{tpu_custom_call.1} parent=1 // pred_region
      _
    $region17: #{tpu_custom_call.1} parent=1 // pred_fallthru
      _
    // Predicated region
    $region18: #{tpu_custom_call.1} parent=1 // pred_check
      _
    $region19: #{tpu_custom_call.1} parent=1 // pred_check_branch
      %20 = sbr.rel (0) target = $region21
    $region20: #{tpu_custom_call.1} parent=1 // pred_region
      _
    $region21: #{tpu_custom_call.1} parent=1 // pred_fallthru
      _
    %p22 = scmp.eq.s32.totalorder 0, 0
    // Predicated region
    $region22: #{tpu_custom_call.1} parent=1 // pred_check
      %p23 = pneg %p22
    $region23: #{tpu_custom_call.1} parent=1 // pred_check_branch
      %25 = sbr.rel (%p23) target = $region25
    $region24: #{tpu_custom_call.1} parent=1 // pred_region
      %26 = vst [vmem:[#allocation2] sm:$0xff] 0.0
    $region25: #{tpu_custom_call.1} parent=1 // pred_fallthru
      _
    %v27 = vld [vmem:[%s0] sm:$0xf]
    %v28 = vld [vmem:[%s0 + $0x4] sm:$0xf]
    %v29 = vld [vmem:[%s0 + $0x8] sm:$0xf]
    %v30 = vld [vmem:[%s0 + $0xc] sm:$0xf]
    %v31 = vld [vmem:[%s0 + $0x10] sm:$0xf]
    %v32 = vld [vmem:[%s0 + $0x14] sm:$0xf]
    %v33 = vld [vmem:[%s0 + $0x18] sm:$0xf]
    %v34 = vld [vmem:[%s0 + $0x1c] sm:$0xf]
    %v35 = vld [vmem:[%s0 + $0x20] sm:$0xf]
    %v36 = vld [vmem:[%s0 + $0x24] sm:$0xf]
    %v37 = vld [vmem:[%s0 + $0x28] sm:$0xf]
    %v38 = vld [vmem:[%s0 + $0x2c] sm:$0xf]
    %v39 = vld [vmem:[%s0 + $0x30] sm:$0xf]
    %v40 = vld [vmem:[%s0 + $0x34] sm:$0xf]
    %v41 = vld [vmem:[%s0 + $0x38] sm:$0xf]
    %v42 = vld [vmem:[%s0 + $0x3c] sm:$0xf]
    %v43 = vld [vmem:[%s0 + $0x40] sm:$0xf]
    %v44 = vld [vmem:[%s0 + $0x44] sm:$0xf]
    %v45 = vld [vmem:[%s0 + $0x48] sm:$0xf]
    %v46 = vld [vmem:[%s0 + $0x4c] sm:$0xf]
    %v47 = vld [vmem:[%s0 + $0x50] sm:$0xf]
    %v48 = vld [vmem:[%s0 + $0x54] sm:$0xf]
    %v49 = vld [vmem:[%s0 + $0x58] sm:$0xf]
    %v50 = vld [vmem:[%s0 + $0x5c] sm:$0xf]
    %v51 = vld [vmem:[%s0 + $0x60] sm:$0xf]
    %v52 = vld [vmem:[%s0 + $0x64] sm:$0xf]
    %v53 = vld [vmem:[%s0 + $0x68] sm:$0xf]
    %v54 = vld [vmem:[%s0 + $0x6c] sm:$0xf]
    %v55 = vld [vmem:[%s0 + $0x70] sm:$0xf]
    %v56 = vld [vmem:[%s0 + $0x74] sm:$0xf]
    %v57 = vld [vmem:[%s0 + $0x78] sm:$0xf]
    %v58 = vld [vmem:[%s0 + $0x7c] sm:$0xf]
    %v59 = vld [vmem:[%s0 + $0x80] sm:$0xf]
    %v60 = vld [vmem:[%s0 + $0x84] sm:$0xf]
    %v61 = vld [vmem:[%s0 + $0x88] sm:$0xf]
    %v62 = vld [vmem:[%s0 + $0x8c] sm:$0xf]
    %v63 = vld [vmem:[%s0 + $0x90] sm:$0xf]
    %v64 = vld [vmem:[%s0 + $0x94] sm:$0xf]
    %v65 = vld [vmem:[%s0 + $0x98] sm:$0xf]
    %v66 = vld [vmem:[%s0 + $0x9c] sm:$0xf]
    %v67 = vld [vmem:[%s0 + $0xa0] sm:$0xf]
    %v68 = vld [vmem:[%s0 + $0xa4] sm:$0xf]
    %v69 = vld [vmem:[%s0 + $0xa8] sm:$0xf]
    %v70 = vld [vmem:[%s0 + $0xac] sm:$0xf]
    %v71 = vld [vmem:[%s0 + $0xb0] sm:$0xf]
    %v72 = vld [vmem:[%s0 + $0xb4] sm:$0xf]
    %v73 = vld [vmem:[%s0 + $0xb8] sm:$0xf]
    %v74 = vld [vmem:[%s0 + $0xbc] sm:$0xf]
    %v75 = vld [vmem:[%s0 + $0xc0] sm:$0xf]
    %v76 = vld [vmem:[%s0 + $0xc4] sm:$0xf]
    %v77 = vld [vmem:[%s0 + $0xc8] sm:$0xf]
    %v78 = vld [vmem:[%s0 + $0xcc] sm:$0xf]
    %v79 = vld [vmem:[%s0 + $0xd0] sm:$0xf]
    %v80 = vld [vmem:[%s0 + $0xd4] sm:$0xf]
    %v81 = vld [vmem:[%s0 + $0xd8] sm:$0xf]
    %v82 = vld [vmem:[%s0 + $0xdc] sm:$0xf]
    %v83 = vld [vmem:[%s0 + $0xe0] sm:$0xf]
    %v84 = vld [vmem:[%s0 + $0xe4] sm:$0xf]
    %v85 = vld [vmem:[%s0 + $0xe8] sm:$0xf]
    %v86 = vld [vmem:[%s0 + $0xec] sm:$0xf]
    %v87 = vld [vmem:[%s0 + $0xf0] sm:$0xf]
    %v88 = vld [vmem:[%s0 + $0xf4] sm:$0xf]
    %v89 = vld [vmem:[%s0 + $0xf8] sm:$0xf]
    %v90 = vld [vmem:[%s0 + $0xfc] sm:$0xf]
    %v91 = vld [vmem:[%s1] sm:$0xf]
    %v92 = vld [vmem:[%s1 + $0x4] sm:$0xf]
    %v93 = vld [vmem:[%s1 + $0x8] sm:$0xf]
    %v94 = vld [vmem:[%s1 + $0xc] sm:$0xf]
    %v95 = vld [vmem:[%s1 + $0x10] sm:$0x3]
    %v96 = vld [vmem:[%s2] sm:$0x1]
    %v98 = vlaneseq
    %v99 = vshrl.u32 %v98, 7
    %v100 = vsub.s32 0, %v99
    %v101 = vrot.slane %v96, %v100
    %v167 = vunpack.c.l.b16 %v27
    %v168 = vunpack.c.l.b16 %v28
    %v169 = vunpack.c.l.b16 %v29
    %v170 = vunpack.c.l.b16 %v30
    %v171 = vunpack.c.l.b16 %v31
    %v172 = vunpack.c.l.b16 %v32
    %v173 = vunpack.c.l.b16 %v33
    %v174 = vunpack.c.l.b16 %v34
    %v175 = vunpack.c.l.b16 %v35
    %v176 = vunpack.c.l.b16 %v36
    %v177 = vunpack.c.l.b16 %v37
    %v178 = vunpack.c.l.b16 %v38
    %v179 = vunpack.c.l.b16 %v39
    %v180 = vunpack.c.l.b16 %v40
    %v181 = vunpack.c.l.b16 %v41
    %v182 = vunpack.c.l.b16 %v42
    %v183 = vunpack.c.l.b16 %v43
    %v184 = vunpack.c.l.b16 %v44
    %v185 = vunpack.c.l.b16 %v45
    %v186 = vunpack.c.l.b16 %v46
    %v187 = vunpack.c.l.b16 %v47
    %v188 = vunpack.c.l.b16 %v48
    %v189 = vunpack.c.l.b16 %v49
    %v190 = vunpack.c.l.b16 %v50
    %v191 = vunpack.c.l.b16 %v51
    %v192 = vunpack.c.l.b16 %v52
    %v193 = vunpack.c.l.b16 %v53
    %v194 = vunpack.c.l.b16 %v54
    %v195 = vunpack.c.l.b16 %v55
    %v196 = vunpack.c.l.b16 %v56
    %v197 = vunpack.c.l.b16 %v57
    %v198 = vunpack.c.l.b16 %v58
    %v199 = vunpack.c.l.b16 %v59
    %v200 = vunpack.c.l.b16 %v60
    %v201 = vunpack.c.l.b16 %v61
    %v202 = vunpack.c.l.b16 %v62
    %v203 = vunpack.c.l.b16 %v63
    %v204 = vunpack.c.l.b16 %v64
    %v205 = vunpack.c.l.b16 %v65
    %v206 = vunpack.c.l.b16 %v66
    %v207 = vunpack.c.l.b16 %v67
    %v208 = vunpack.c.l.b16 %v68
    %v209 = vunpack.c.l.b16 %v69
    %v210 = vunpack.c.l.b16 %v70
    %v211 = vunpack.c.l.b16 %v71
    %v212 = vunpack.c.l.b16 %v72
    %v213 = vunpack.c.l.b16 %v73
    %v214 = vunpack.c.l.b16 %v74
    %v215 = vunpack.c.l.b16 %v75
    %v216 = vunpack.c.l.b16 %v76
    %v217 = vunpack.c.l.b16 %v77
    %v218 = vunpack.c.l.b16 %v78
    %v219 = vunpack.c.l.b16 %v79
    %v220 = vunpack.c.l.b16 %v80
    %v221 = vunpack.c.l.b16 %v81
    %v222 = vunpack.c.l.b16 %v82
    %v223 = vunpack.c.l.b16 %v83
    %v224 = vunpack.c.l.b16 %v84
    %v225 = vunpack.c.l.b16 %v85
    %v226 = vunpack.c.l.b16 %v86
    %v227 = vunpack.c.l.b16 %v87
    %v228 = vunpack.c.l.b16 %v88
    %v229 = vunpack.c.l.b16 %v89
    %v230 = vunpack.c.l.b16 %v90
    %v231 = vpack.c.b16 %v168, %v167
    %v232 = vpack.c.b16 %v170, %v169
    %v233 = vpack.c.b16 %v172, %v171
    %v234 = vpack.c.b16 %v174, %v173
    %v235 = vpack.c.b16 %v176, %v175
    %v236 = vpack.c.b16 %v178, %v177
    %v237 = vpack.c.b16 %v180, %v179
    %v238 = vpack.c.b16 %v182, %v181
    %v239 = vpack.c.b16 %v184, %v183
    %v240 = vpack.c.b16 %v186, %v185
    %v241 = vpack.c.b16 %v188, %v187
    %v242 = vpack.c.b16 %v190, %v189
    %v243 = vpack.c.b16 %v192, %v191
    %v244 = vpack.c.b16 %v194, %v193
    %v245 = vpack.c.b16 %v196, %v195
    %v246 = vpack.c.b16 %v198, %v197
    %v247 = vpack.c.b16 %v200, %v199
    %v248 = vpack.c.b16 %v202, %v201
    %v249 = vpack.c.b16 %v204, %v203
    %v250 = vpack.c.b16 %v206, %v205
    %v251 = vpack.c.b16 %v208, %v207
    %v252 = vpack.c.b16 %v210, %v209
    %v253 = vpack.c.b16 %v212, %v211
    %v254 = vpack.c.b16 %v214, %v213
    %v255 = vpack.c.b16 %v216, %v215
    %v256 = vpack.c.b16 %v218, %v217
    %v257 = vpack.c.b16 %v220, %v219
    %v258 = vpack.c.b16 %v222, %v221
    %v259 = vpack.c.b16 %v224, %v223
    %v260 = vpack.c.b16 %v226, %v225
    %v261 = vpack.c.b16 %v228, %v227
    %v262 = vpack.c.b16 %v230, %v229
    %v268 = vunpack.c.l.b16 %v91
    %v269 = vunpack.c.l.b16 %v92
    %v270 = vunpack.c.l.b16 %v93
    %v271 = vunpack.c.l.b16 %v94
    %v272 = vunpack.c.l.b16 %v95
    %v273 = vpack.c.b16 %v269, %v268
    %v274 = vpack.c.b16 %v271, %v270
    %v275 = vpack.c.b16 %v272, %v272
    %vm278 = vcmask 293888
    %v280 = vsel %vm278, %v231, 0
    %v283 = vsel %vm278, %v232, 0
    %v286 = vsel %vm278, %v233, 0
    %v289 = vsel %vm278, %v234, 0
    %v292 = vsel %vm278, %v235, 0
    %v295 = vsel %vm278, %v236, 0
    %v298 = vsel %vm278, %v237, 0
    %v301 = vsel %vm278, %v238, 0
    %v304 = vsel %vm278, %v239, 0
    %v307 = vsel %vm278, %v240, 0
    %v310 = vsel %vm278, %v241, 0
    %v313 = vsel %vm278, %v242, 0
    %v316 = vsel %vm278, %v243, 0
    %v319 = vsel %vm278, %v244, 0
    %v322 = vsel %vm278, %v245, 0
    %v325 = vsel %vm278, %v246, 0
    %v328 = vsel %vm278, %v247, 0
    %v331 = vsel %vm278, %v248, 0
    %v334 = vsel %vm278, %v249, 0
    %v337 = vsel %vm278, %v250, 0
    %v340 = vsel %vm278, %v251, 0
    %v343 = vsel %vm278, %v252, 0
    %v346 = vsel %vm278, %v253, 0
    %v349 = vsel %vm278, %v254, 0
    %v352 = vsel %vm278, %v255, 0
    %v355 = vsel %vm278, %v256, 0
    %v358 = vsel %vm278, %v257, 0
    %v361 = vsel %vm278, %v258, 0
    %v364 = vsel %vm278, %v259, 0
    %v367 = vsel %vm278, %v260, 0
    %v370 = vsel %vm278, %v261, 0
    %v373 = vsel %vm278, %v262, 0
    %vm375 = vcmask 1041408
    %v377 = vsel %vm375, %v275, 0
    %379 = vmatprep.subr.bf16.mxu0 0
    %380 = vmatpush1.bf16.msra.mxu0 %v273
    %381 = vmatprep.subr.bf16.mxu0 0
    %382 = vmatpush1.bf16.msra.mxu0 %v274
    %383 = vmatprep.subr.bf16.mxu0 0
    %384 = vmatpush1.bf16.msra.mxu0 %v377
    %385 = vmatprep.subr.bf16.mxu0 0
    %386 = vmatpush1.bf16.msra.mxu0 0
    %387 = vmatprep.subr.bf16.mxu0 0
    %388 = vmatpush1.bf16.msra.mxu0 0
    %389 = vmatprep.subr.bf16.mxu0 0
    %390 = vmatpush1.bf16.msra.mxu0 0
    %391 = vmatprep.subr.bf16.mxu0 0
    %392 = vmatpush1.bf16.msra.mxu0 0
    %393 = vmatprep.subr.bf16.mxu0 0
    %394 = vmatpush1.bf16.msra.mxu0 0
    %395 = vmatprep.subr.bf16.mxu0 0
    %396 = vmatpush1.bf16.msra.mxu0 0
    %397 = vmatprep.subr.bf16.mxu0 0
    %398 = vmatpush1.bf16.msra.mxu0 0
    %399 = vmatprep.subr.bf16.mxu0 0
    %400 = vmatpush1.bf16.msra.mxu0 0
    %401 = vmatprep.subr.bf16.mxu0 0
    %402 = vmatpush1.bf16.msra.mxu0 0
    %403 = vmatprep.subr.bf16.mxu0 0
    %404 = vmatpush1.bf16.msra.mxu0 0
    %405 = vmatprep.subr.bf16.mxu0 0
    %406 = vmatpush1.bf16.msra.mxu0 0
    %407 = vmatprep.subr.bf16.mxu0 0
    %408 = vmatpush1.bf16.msra.mxu0 0
    %409 = vmatprep.subr.bf16.mxu0 0
    %410 = vmatpush1.bf16.msra.mxu0 0
    %411 = vmatprep.mubr.bf16.mxu0 0
    %412 = vmatmul.mubr.bf16.gmra.mrb[0].mxu0 %v280
    %v413 = vpop.f32.mrb[0].mxu0
    %v414 = vadd.f32 %v101, %v413
    %v415 = vpop.f32.mrb[0].mxu0
    %v416 = vpop.f32.mrb[0].mxu0
    %v417 = vadd.f32 %v101, %v416
    %v418 = vpop.f32.mrb[0].mxu0
    %419 = vmatprep.mubr.bf16.mxu0 0
    %420 = vmatmul.mubr.bf16.gmra.mrb[0].mxu0 %v283
    %v421 = vpop.f32.mrb[0].mxu0
    %v422 = vadd.f32 %v101, %v421
    %v423 = vpop.f32.mrb[0].mxu0
    %v424 = vpop.f32.mrb[0].mxu0
    %v425 = vadd.f32 %v101, %v424
    %v426 = vpop.f32.mrb[0].mxu0
    %427 = vmatprep.mubr.bf16.mxu0 0
    %428 = vmatmul.mubr.bf16.gmra.mrb[0].mxu0 %v286
    %v429 = vpop.f32.mrb[0].mxu0
    %v430 = vadd.f32 %v101, %v429
    %v431 = vpop.f32.mrb[0].mxu0
    %v432 = vpop.f32.mrb[0].mxu0
    %v433 = vadd.f32 %v101, %v432
    %v434 = vpop.f32.mrb[0].mxu0
    %435 = vmatprep.mubr.bf16.mxu0 0
    %436 = vmatmul.mubr.bf16.gmra.mrb[0].mxu0 %v289
    %v437 = vpop.f32.mrb[0].mxu0
    %v438 = vadd.f32 %v101, %v437
    %v439 = vpop.f32.mrb[0].mxu0
    %v440 = vpop.f32.mrb[0].mxu0
    %v441 = vadd.f32 %v101, %v440
    %v442 = vpop.f32.mrb[0].mxu0
    %443 = vmatprep.mubr.bf16.mxu0 0
    %444 = vmatmul.mubr.bf16.gmra.mrb[0].mxu0 %v292
    %v445 = vpop.f32.mrb[0].mxu0
    %v446 = vadd.f32 %v101, %v445
    %v447 = vpop.f32.mrb[0].mxu0
    %v448 = vpop.f32.mrb[0].mxu0
    %v449 = vadd.f32 %v101, %v448
    %v450 = vpop.f32.mrb[0].mxu0
    %451 = vmatprep.mubr.bf16.mxu0 0
    %452 = vmatmul.mubr.bf16.gmra.mrb[0].mxu0 %v295
    %v453 = vpop.f32.mrb[0].mxu0
    %v454 = vadd.f32 %v101, %v453
    %v455 = vpop.f32.mrb[0].mxu0
    %v456 = vpop.f32.mrb[0].mxu0
    %v457 = vadd.f32 %v101, %v456
    %v458 = vpop.f32.mrb[0].mxu0
    %459 = vmatprep.mubr.bf16.mxu0 0
    %460 = vmatmul.mubr.bf16.gmra.mrb[0].mxu0 %v298
    %v461 = vpop.f32.mrb[0].mxu0
    %v462 = vadd.f32 %v101, %v461
    %v463 = vpop.f32.mrb[0].mxu0
    %v464 = vpop.f32.mrb[0].mxu0
    %v465 = vadd.f32 %v101, %v464
    %v466 = vpop.f32.mrb[0].mxu0
    %467 = vmatprep.mubr.bf16.mxu0 0
    %468 = vmatmul.mubr.bf16.gmra.mrb[0].mxu0 %v301
    %v469 = vpop.f32.mrb[0].mxu0
    %v470 = vadd.f32 %v101, %v469
    %v471 = vpop.f32.mrb[0].mxu0
    %v472 = vpop.f32.mrb[0].mxu0
    %v473 = vadd.f32 %v101, %v472
    %v474 = vpop.f32.mrb[0].mxu0
    %475 = vmatprep.mubr.bf16.mxu0 0
    %476 = vmatmul.mubr.bf16.gmra.mrb[0].mxu0 %v304
    %v477 = vpop.f32.mrb[0].mxu0
    %v478 = vadd.f32 %v101, %v477
    %v479 = vpop.f32.mrb[0].mxu0
    %v480 = vpop.f32.mrb[0].mxu0
    %v481 = vadd.f32 %v101, %v480
    %v482 = vpop.f32.mrb[0].mxu0
    %483 = vmatprep.mubr.bf16.mxu0 0
    %484 = vmatmul.mubr.bf16.gmra.mrb[0].mxu0 %v307
    %v485 = vpop.f32.mrb[0].mxu0
    %v486 = vadd.f32 %v101, %v485
    %v487 = vpop.f32.mrb[0].mxu0
    %v488 = vpop.f32.mrb[0].mxu0
    %v489 = vadd.f32 %v101, %v488
    %v490 = vpop.f32.mrb[0].mxu0
    %491 = vmatprep.mubr.bf16.mxu0 0
    %492 = vmatmul.mubr.bf16.gmra.mrb[0].mxu0 %v310
    %v493 = vpop.f32.mrb[0].mxu0
    %v494 = vadd.f32 %v101, %v493
    %v495 = vpop.f32.mrb[0].mxu0
    %v496 = vpop.f32.mrb[0].mxu0
    %v497 = vadd.f32 %v101, %v496
    %v498 = vpop.f32.mrb[0].mxu0
    %499 = vmatprep.mubr.bf16.mxu0 0
    %500 = vmatmul.mubr.bf16.gmra.mrb[0].mxu0 %v313
    %v501 = vpop.f32.mrb[0].mxu0
    %v502 = vadd.f32 %v101, %v501
    %v503 = vpop.f32.mrb[0].mxu0
    %v504 = vpop.f32.mrb[0].mxu0
    %v505 = vadd.f32 %v101, %v504
    %v506 = vpop.f32.mrb[0].mxu0
    %507 = vmatprep.mubr.bf16.mxu0 0
    %508 = vmatmul.mubr.bf16.gmra.mrb[0].mxu0 %v316
    %v509 = vpop.f32.mrb[0].mxu0
    %v510 = vadd.f32 %v101, %v509
    %v511 = vpop.f32.mrb[0].mxu0
    %v512 = vpop.f32.mrb[0].mxu0
    %v513 = vadd.f32 %v101, %v512
    %v514 = vpop.f32.mrb[0].mxu0
    %515 = vmatprep.mubr.bf16.mxu0 0
    %516 = vmatmul.mubr.bf16.gmra.mrb[0].mxu0 %v319
    %v517 = vpop.f32.mrb[0].mxu0
    %v518 = vadd.f32 %v101, %v517
    %v519 = vpop.f32.mrb[0].mxu0
    %v520 = vpop.f32.mrb[0].mxu0
    %v521 = vadd.f32 %v101, %v520
    %v522 = vpop.f32.mrb[0].mxu0
    %523 = vmatprep.mubr.bf16.mxu0 0
    %524 = vmatmul.mubr.bf16.gmra.mrb[0].mxu0 %v322
    %v525 = vpop.f32.mrb[0].mxu0
    %v526 = vadd.f32 %v101, %v525
    %v527 = vpop.f32.mrb[0].mxu0
    %v528 = vpop.f32.mrb[0].mxu0
    %v529 = vadd.f32 %v101, %v528
    %v530 = vpop.f32.mrb[0].mxu0
    %531 = vmatprep.mubr.bf16.mxu0 0
    %532 = vmatmul.mubr.bf16.gmra.mrb[0].mxu0 %v325
    %v533 = vpop.f32.mrb[0].mxu0
    %v534 = vadd.f32 %v101, %v533
    %v535 = vpop.f32.mrb[0].mxu0
    %v536 = vpop.f32.mrb[0].mxu0
    %v537 = vadd.f32 %v101, %v536
    %v538 = vpop.f32.mrb[0].mxu0
    %539 = vmatprep.mubr.bf16.mxu0 0
    %540 = vmatmul.mubr.bf16.gmra.mrb[0].mxu0 %v328
    %v541 = vpop.f32.mrb[0].mxu0
    %v542 = vadd.f32 %v101, %v541
    %v543 = vpop.f32.mrb[0].mxu0
    %v544 = vpop.f32.mrb[0].mxu0
    %v545 = vadd.f32 %v101, %v544
    %v546 = vpop.f32.mrb[0].mxu0
    %547 = vmatprep.mubr.bf16.mxu0 0
    %548 = vmatmul.mubr.bf16.gmra.mrb[0].mxu0 %v331
    %v549 = vpop.f32.mrb[0].mxu0
    %v550 = vadd.f32 %v101, %v549
    %v551 = vpop.f32.mrb[0].mxu0
    %v552 = vpop.f32.mrb[0].mxu0
    %v553 = vadd.f32 %v101, %v552
    %v554 = vpop.f32.mrb[0].mxu0
    %555 = vmatprep.mubr.bf16.mxu0 0
    %556 = vmatmul.mubr.bf16.gmra.mrb[0].mxu0 %v334
    %v557 = vpop.f32.mrb[0].mxu0
    %v558 = vadd.f32 %v101, %v557
    %v559 = vpop.f32.mrb[0].mxu0
    %v560 = vpop.f32.mrb[0].mxu0
    %v561 = vadd.f32 %v101, %v560
    %v562 = vpop.f32.mrb[0].mxu0
    %563 = vmatprep.mubr.bf16.mxu0 0
    %564 = vmatmul.mubr.bf16.gmra.mrb[0].mxu0 %v337
    %v565 = vpop.f32.mrb[0].mxu0
    %v566 = vadd.f32 %v101, %v565
    %v567 = vpop.f32.mrb[0].mxu0
    %v568 = vpop.f32.mrb[0].mxu0
    %v569 = vadd.f32 %v101, %v568
    %v570 = vpop.f32.mrb[0].mxu0
    %571 = vmatprep.mubr.bf16.mxu0 0
    %572 = vmatmul.mubr.bf16.gmra.mrb[0].mxu0 %v340
    %v573 = vpop.f32.mrb[0].mxu0
    %v574 = vadd.f32 %v101, %v573
    %v575 = vpop.f32.mrb[0].mxu0
    %v576 = vpop.f32.mrb[0].mxu0
    %v577 = vadd.f32 %v101, %v576
    %v578 = vpop.f32.mrb[0].mxu0
    %579 = vmatprep.mubr.bf16.mxu0 0
    %580 = vmatmul.mubr.bf16.gmra.mrb[0].mxu0 %v343
    %v581 = vpop.f32.mrb[0].mxu0
    %v582 = vadd.f32 %v101, %v581
    %v583 = vpop.f32.mrb[0].mxu0
    %v584 = vpop.f32.mrb[0].mxu0
    %v585 = vadd.f32 %v101, %v584
    %v586 = vpop.f32.mrb[0].mxu0
    %587 = vmatprep.mubr.bf16.mxu0 0
    %588 = vmatmul.mubr.bf16.gmra.mrb[0].mxu0 %v346
    %v589 = vpop.f32.mrb[0].mxu0
    %v590 = vadd.f32 %v101, %v589
    %v591 = vpop.f32.mrb[0].mxu0
    %v592 = vpop.f32.mrb[0].mxu0
    %v593 = vadd.f32 %v101, %v592
    %v594 = vpop.f32.mrb[0].mxu0
    %595 = vmatprep.mubr.bf16.mxu0 0
    %596 = vmatmul.mubr.bf16.gmra.mrb[0].mxu0 %v349
    %v597 = vpop.f32.mrb[0].mxu0
    %v598 = vadd.f32 %v101, %v597
    %v599 = vpop.f32.mrb[0].mxu0
    %v600 = vpop.f32.mrb[0].mxu0
    %v601 = vadd.f32 %v101, %v600
    %v602 = vpop.f32.mrb[0].mxu0
    %603 = vmatprep.mubr.bf16.mxu0 0
    %604 = vmatmul.mubr.bf16.gmra.mrb[0].mxu0 %v352
    %v605 = vpop.f32.mrb[0].mxu0
    %v606 = vadd.f32 %v101, %v605
    %v607 = vpop.f32.mrb[0].mxu0
    %v608 = vpop.f32.mrb[0].mxu0
    %v609 = vadd.f32 %v101, %v608
    %v610 = vpop.f32.mrb[0].mxu0
    %611 = vmatprep.mubr.bf16.mxu0 0
    %612 = vmatmul.mubr.bf16.gmra.mrb[0].mxu0 %v355
    %v613 = vpop.f32.mrb[0].mxu0
    %v614 = vadd.f32 %v101, %v613
    %v615 = vpop.f32.mrb[0].mxu0
    %v616 = vpop.f32.mrb[0].mxu0
    %v617 = vadd.f32 %v101, %v616
    %v618 = vpop.f32.mrb[0].mxu0
    %619 = vmatprep.mubr.bf16.mxu0 0
    %620 = vmatmul.mubr.bf16.gmra.mrb[0].mxu0 %v358
    %v621 = vpop.f32.mrb[0].mxu0
    %v622 = vadd.f32 %v101, %v621
    %v623 = vpop.f32.mrb[0].mxu0
    %v624 = vpop.f32.mrb[0].mxu0
    %v625 = vadd.f32 %v101, %v624
    %v626 = vpop.f32.mrb[0].mxu0
    %627 = vmatprep.mubr.bf16.mxu0 0
    %628 = vmatmul.mubr.bf16.gmra.mrb[0].mxu0 %v361
    %v629 = vpop.f32.mrb[0].mxu0
    %v630 = vadd.f32 %v101, %v629
    %v631 = vpop.f32.mrb[0].mxu0
    %v632 = vpop.f32.mrb[0].mxu0
    %v633 = vadd.f32 %v101, %v632
    %v634 = vpop.f32.mrb[0].mxu0
    %635 = vmatprep.mubr.bf16.mxu0 0
    %636 = vmatmul.mubr.bf16.gmra.mrb[0].mxu0 %v364
    %v637 = vpop.f32.mrb[0].mxu0
    %v638 = vadd.f32 %v101, %v637
    %v639 = vpop.f32.mrb[0].mxu0
    %v640 = vpop.f32.mrb[0].mxu0
    %v641 = vadd.f32 %v101, %v640
    %v642 = vpop.f32.mrb[0].mxu0
    %643 = vmatprep.mubr.bf16.mxu0 0
    %644 = vmatmul.mubr.bf16.gmra.mrb[0].mxu0 %v367
    %v645 = vpop.f32.mrb[0].mxu0
    %v646 = vadd.f32 %v101, %v645
    %v647 = vpop.f32.mrb[0].mxu0
    %v648 = vpop.f32.mrb[0].mxu0
    %v649 = vadd.f32 %v101, %v648
    %v650 = vpop.f32.mrb[0].mxu0
    %651 = vmatprep.mubr.bf16.mxu0 0
    %652 = vmatmul.mubr.bf16.gmra.mrb[0].mxu0 %v370
    %v653 = vpop.f32.mrb[0].mxu0
    %v654 = vadd.f32 %v101, %v653
    %v655 = vpop.f32.mrb[0].mxu0
    %v656 = vpop.f32.mrb[0].mxu0
    %v657 = vadd.f32 %v101, %v656
    %v658 = vpop.f32.mrb[0].mxu0
    %659 = vmatprep.mubr.bf16.mxu0 0
    %660 = vmatmul.mubr.bf16.gmra.mrb[0].mxu0 %v373
    %v661 = vpop.f32.mrb[0].mxu0
    %v662 = vadd.f32 %v101, %v661
    %v663 = vpop.f32.mrb[0].mxu0
    %v664 = vpop.f32.mrb[0].mxu0
    %v665 = vadd.f32 %v101, %v664
    %v666 = vpop.f32.mrb[0].mxu0
    %667 = vdwg.mxu0
    %v668 = vmax.f32 %v414, 0.0
    %v669 = vmax.f32 %v417, 0.0
    %v670 = vmax.f32 %v422, 0.0
    %v671 = vmax.f32 %v425, 0.0
    %v672 = vmax.f32 %v430, 0.0
    %v673 = vmax.f32 %v433, 0.0
    %v674 = vmax.f32 %v438, 0.0
    %v675 = vmax.f32 %v441, 0.0
    %v676 = vmax.f32 %v446, 0.0
    %v677 = vmax.f32 %v449, 0.0
    %v678 = vmax.f32 %v454, 0.0
    %v679 = vmax.f32 %v457, 0.0
    %v680 = vmax.f32 %v462, 0.0
    %v681 = vmax.f32 %v465, 0.0
    %v682 = vmax.f32 %v470, 0.0
    %v683 = vmax.f32 %v473, 0.0
    %v684 = vmax.f32 %v478, 0.0
    %v685 = vmax.f32 %v481, 0.0
    %v686 = vmax.f32 %v486, 0.0
    %v687 = vmax.f32 %v489, 0.0
    %v688 = vmax.f32 %v494, 0.0
    %v689 = vmax.f32 %v497, 0.0
    %v690 = vmax.f32 %v502, 0.0
    %v691 = vmax.f32 %v505, 0.0
    %v692 = vmax.f32 %v510, 0.0
    %v693 = vmax.f32 %v513, 0.0
    %v694 = vmax.f32 %v518, 0.0
    %v695 = vmax.f32 %v521, 0.0
    %v696 = vmax.f32 %v526, 0.0
    %v697 = vmax.f32 %v529, 0.0
    %v698 = vmax.f32 %v534, 0.0
    %v699 = vmax.f32 %v537, 0.0
    %v700 = vmax.f32 %v542, 0.0
    %v701 = vmax.f32 %v545, 0.0
    %v702 = vmax.f32 %v550, 0.0
    %v703 = vmax.f32 %v553, 0.0
    %v704 = vmax.f32 %v558, 0.0
    %v705 = vmax.f32 %v561, 0.0
    %v706 = vmax.f32 %v566, 0.0
    %v707 = vmax.f32 %v569, 0.0
    %v708 = vmax.f32 %v574, 0.0
    %v709 = vmax.f32 %v577, 0.0
    %v710 = vmax.f32 %v582, 0.0
    %v711 = vmax.f32 %v585, 0.0
    %v712 = vmax.f32 %v590, 0.0
    %v713 = vmax.f32 %v593, 0.0
    %v714 = vmax.f32 %v598, 0.0
    %v715 = vmax.f32 %v601, 0.0
    %v716 = vmax.f32 %v606, 0.0
    %v717 = vmax.f32 %v609, 0.0
    %v718 = vmax.f32 %v614, 0.0
    %v719 = vmax.f32 %v617, 0.0
    %v720 = vmax.f32 %v622, 0.0
    %v721 = vmax.f32 %v625, 0.0
    %v722 = vmax.f32 %v630, 0.0
    %v723 = vmax.f32 %v633, 0.0
    %v724 = vmax.f32 %v638, 0.0
    %v725 = vmax.f32 %v641, 0.0
    %v726 = vmax.f32 %v646, 0.0
    %v727 = vmax.f32 %v649, 0.0
    %v728 = vmax.f32 %v654, 0.0
    %v729 = vmax.f32 %v657, 0.0
    %v730 = vmax.f32 %v662, 0.0
    %v731 = vmax.f32 %v665, 0.0
    %v732 = vld [vmem:[#allocation2] sm:$0xff]
    %v733 = vadd.f32 %v668, %v669
    %v734 = vadd.f32 %v733, %v670
    %v735 = vadd.f32 %v734, %v671
    %v736 = vadd.f32 %v735, %v672
    %v737 = vadd.f32 %v736, %v673
    %v738 = vadd.f32 %v737, %v674
    %v739 = vadd.f32 %v738, %v675
    %v740 = vadd.f32 %v739, %v676
    %v741 = vadd.f32 %v740, %v677
    %v742 = vadd.f32 %v741, %v678
    %v743 = vadd.f32 %v742, %v679
    %v744 = vadd.f32 %v743, %v680
    %v745 = vadd.f32 %v744, %v681
    %v746 = vadd.f32 %v745, %v682
    %v747 = vadd.f32 %v746, %v683
    %v748 = vadd.f32 %v747, %v684
    %v749 = vadd.f32 %v748, %v685
    %v750 = vadd.f32 %v749, %v686
    %v751 = vadd.f32 %v750, %v687
    %v752 = vadd.f32 %v751, %v688
    %v753 = vadd.f32 %v752, %v689
    %v754 = vadd.f32 %v753, %v690
    %v755 = vadd.f32 %v754, %v691
    %v756 = vadd.f32 %v755, %v692
    %v757 = vadd.f32 %v756, %v693
    %v758 = vadd.f32 %v757, %v694
    %v759 = vadd.f32 %v758, %v695
    %v760 = vadd.f32 %v759, %v696
    %v761 = vadd.f32 %v760, %v697
    %v762 = vadd.f32 %v761, %v698
    %v763 = vadd.f32 %v762, %v699
    %v764 = vadd.f32 %v763, %v700
    %v765 = vadd.f32 %v764, %v701
    %v766 = vadd.f32 %v765, %v702
    %v767 = vadd.f32 %v766, %v703
    %v768 = vadd.f32 %v767, %v704
    %v769 = vadd.f32 %v768, %v705
    %v770 = vadd.f32 %v769, %v706
    %v771 = vadd.f32 %v770, %v707
    %v772 = vadd.f32 %v771, %v708
    %v773 = vadd.f32 %v772, %v709
    %v774 = vadd.f32 %v773, %v710
    %v775 = vadd.f32 %v774, %v711
    %v776 = vadd.f32 %v775, %v712
    %v777 = vadd.f32 %v776, %v713
    %v778 = vadd.f32 %v777, %v714
    %v779 = vadd.f32 %v778, %v715
    %v780 = vadd.f32 %v779, %v716
    %v781 = vadd.f32 %v780, %v717
    %v782 = vadd.f32 %v781, %v718
    %v783 = vadd.f32 %v782, %v719
    %v784 = vadd.f32 %v783, %v720
    %v785 = vadd.f32 %v784, %v721
    %v786 = vadd.f32 %v785, %v722
    %v787 = vadd.f32 %v786, %v723
    %v788 = vadd.f32 %v787, %v724
    %v789 = vadd.f32 %v788, %v725
    %v790 = vadd.f32 %v789, %v726
    %v791 = vadd.f32 %v790, %v727
    %v792 = vadd.f32 %v791, %v728
    %v793 = vadd.f32 %v792, %v729
    %v794 = vadd.f32 %v793, %v730
    %v795 = vadd.f32 %v794, %v731
    %v796 = vadd.f32 %v732, %v795
    %797 = vst [vmem:[#allocation2] sm:$0xff] %v796
    // Predicated region
    $region26: #{tpu_custom_call.1} parent=1 // pred_check
      %p798 = pneg %p22
    $region27: #{tpu_custom_call.1} parent=1 // pred_check_branch
      %800 = sbr.rel (%p798) target = $region29
    $region28: #{tpu_custom_call.1} parent=1 // pred_region
      %v801 = vld [vmem:[#allocation2] sm:$0xff]
      %v802 = vmul.f32 %v801, 0.015625
      %v803 = vpack.c.bf16 %v802, %v802
      %v804 = vld [vmem:[%s3] sm:$0xf]
      %v805 = vld [vmem:[%s3 + $0x4] sm:$0xf]
      %v806 = vld [vmem:[%s3 + $0x8] sm:$0xf]
      %v807 = vld [vmem:[%s3 + $0xc] sm:$0xf]
      %v808 = vld [vmem:[%s3 + $0x10] sm:$0xf]
      %v809 = vld [vmem:[%s3 + $0x14] sm:$0xf]
      %v810 = vld [vmem:[%s3 + $0x18] sm:$0xf]
      %v811 = vld [vmem:[%s3 + $0x1c] sm:$0xf]
      %v812 = vld [vmem:[%s3 + $0x20] sm:$0xf]
      %v813 = vld [vmem:[%s3 + $0x24] sm:$0xf]
      %v814 = vld [vmem:[%s3 + $0x28] sm:$0xf]
      %v815 = vld [vmem:[%s3 + $0x2c] sm:$0xf]
      %v816 = vld [vmem:[%s3 + $0x30] sm:$0xf]
      %v817 = vld [vmem:[%s3 + $0x34] sm:$0xf]
      %v818 = vld [vmem:[%s3 + $0x38] sm:$0xf]
      %v819 = vld [vmem:[%s3 + $0x3c] sm:$0xf]
      %v820 = vld [vmem:[%s4] sm:$0x1]
      %v822 = vlaneseq
      %v823 = vshrl.u32 %v822, 7
      %v824 = vsub.s32 0, %v823
      %v825 = vrot.slane %v820, %v824
      %v843 = vunpack.c.l.b16 %v804
      %v844 = vunpack.c.l.b16 %v805
      %v845 = vunpack.c.l.b16 %v806
      %v846 = vunpack.c.l.b16 %v807
      %v847 = vunpack.c.l.b16 %v808
      %v848 = vunpack.c.l.b16 %v809
      %v849 = vunpack.c.l.b16 %v810
      %v850 = vunpack.c.l.b16 %v811
      %v851 = vunpack.c.l.b16 %v812
      %v852 = vunpack.c.l.b16 %v813
      %v853 = vunpack.c.l.b16 %v814
      %v854 = vunpack.c.l.b16 %v815
      %v855 = vunpack.c.l.b16 %v816
      %v856 = vunpack.c.l.b16 %v817
      %v857 = vunpack.c.l.b16 %v818
      %v858 = vunpack.c.l.b16 %v819
      %v859 = vpack.c.b16 %v844, %v843
      %v860 = vpack.c.b16 %v846, %v845
      %v861 = vpack.c.b16 %v848, %v847
      %v862 = vpack.c.b16 %v850, %v849
      %v863 = vpack.c.b16 %v852, %v851
      %v864 = vpack.c.b16 %v854, %v853
      %v865 = vpack.c.b16 %v856, %v855
      %v866 = vpack.c.b16 %v858, %v857
      %875 = vmatprep.subr.bf16.mxu0 0
      %876 = vmatpush1.bf16.msra.mxu0 %v859
      %877 = vmatprep.subr.bf16.mxu0 0
      %878 = vmatpush1.bf16.msra.mxu0 %v860
      %879 = vmatprep.subr.bf16.mxu0 0
      %880 = vmatpush1.bf16.msra.mxu0 %v861
      %881 = vmatprep.subr.bf16.mxu0 0
      %882 = vmatpush1.bf16.msra.mxu0 %v862
      %883 = vmatprep.subr.bf16.mxu0 0
      %884 = vmatpush1.bf16.msra.mxu0 %v863
      %885 = vmatprep.subr.bf16.mxu0 0
      %886 = vmatpush1.bf16.msra.mxu0 %v864
      %887 = vmatprep.subr.bf16.mxu0 0
      %888 = vmatpush1.bf16.msra.mxu0 %v865
      %889 = vmatprep.subr.bf16.mxu0 0
      %890 = vmatpush1.bf16.msra.mxu0 %v866
      %891 = vmatprep.subr.bf16.mxu0 0
      %892 = vmatpush1.bf16.msra.mxu0 0
      %893 = vmatprep.subr.bf16.mxu0 0
      %894 = vmatpush1.bf16.msra.mxu0 0
      %895 = vmatprep.subr.bf16.mxu0 0
      %896 = vmatpush1.bf16.msra.mxu0 0
      %897 = vmatprep.subr.bf16.mxu0 0
      %898 = vmatpush1.bf16.msra.mxu0 0
      %899 = vmatprep.subr.bf16.mxu0 0
      %900 = vmatpush1.bf16.msra.mxu0 0
      %901 = vmatprep.subr.bf16.mxu0 0
      %902 = vmatpush1.bf16.msra.mxu0 0
      %903 = vmatprep.subr.bf16.mxu0 0
      %904 = vmatpush1.bf16.msra.mxu0 0
      %905 = vmatprep.subr.bf16.mxu0 0
      %906 = vmatpush1.bf16.msra.mxu0 0
      %907 = vmatprep.mubr.bf16.mxu0 0
      %908 = vmatmul.mubr.bf16.gmra.mrb[0].mxu0 %v803
      %v909 = vpop.f32.mrb[0].mxu0
      %v910 = vadd.f32 %v825, %v909
      %v911 = vpop.f32.mrb[0].mxu0
      %v912 = vpop.f32.mrb[0].mxu0
      %v913 = vpop.f32.mrb[0].mxu0
      %914 = vdwg.mxu0
      %915 = vst [vmem:[#allocation3] sm:$0xff] %v910
    $region29: #{tpu_custom_call.1} parent=1 // pred_fallthru
      _
    // Predicated region
    $region30: #{tpu_custom_call.1} parent=1 // pred_check
      _
    $region31: #{tpu_custom_call.1} parent=1 // pred_check_branch
      %917 = sbr.rel (0) target = $region33
    $region32: #{tpu_custom_call.1} parent=1 // pred_region
      %s919 = ssub.s32 128, 128
      %920 = vsyncadd [#allocation4], %s919
      %s922 = sshll.u32 [#allocation3], 4
      %s923 = int_to_ptr.vmem [resolvable:$true] %s922
      %925 = dma.vmem_to_hbm [thread:$0]  %s923, 128, %s5, [#allocation4]
    $region33: #{tpu_custom_call.1} parent=1 // pred_fallthru
      _
    // Predicated region
    $region34: #{tpu_custom_call.1} parent=1 // pred_check
      _
    $region35: #{tpu_custom_call.1} parent=1 // pred_check_branch
      %927 = sbr.rel (0) target = $region37
    $region36: #{tpu_custom_call.1} parent=1 // pred_region
      %928 = dma.done [#allocation4], 128
    $region37: #{tpu_custom_call.1} parent=1 // pred_fallthru
      _
    %929 = vsyncpa [#allocation4], 1

</llo_original>
